<compile_context>
chip_gen: v7x
topology: tpu7x:2x2x1
jax: 0.10.0
libtpu: 0.0.40
codegen_flags: <defaults>
</compile_context>

<pallas_src>
import jax
import jax.numpy as jnp
from jax.experimental import pallas as pl
from jax.experimental.pallas import tpu as pltpu

NUM_MODS = 10
LANES = 128
MAX_ROW_TILE = 1024  # (1024, 128) f32 tile = 512 KiB


def _reduce_add_lane_dense_kernel(w_ref, v_ref, o_ref):
    # w_ref: (NUM_MODS, 2); v_ref/o_ref: (TILE_ROWS, 128) where the batch is
    # flattened onto lanes as [v[i,0], v[i,1], v[i+1,0], v[i+1,1], ...].
    w_sum = jnp.sum(w_ref[...], axis=0, keepdims=True)       # (1, 2)  sublane reduce (XLU)
    w_row = jnp.tile(w_sum, (1, LANES // 2))                  # (1, 128) pattern [w0,w1,w0,w1,...]
    o_ref[...] = v_ref[...] + w_row                           # single VPU add


def _reduce_add_transposed_kernel(w_ref, v_ref, o_ref):
    # w_ref: (2, NUM_MODS); v_ref/o_ref: (2, B) — batch on lanes.
    w_sum = jnp.sum(w_ref[...], axis=1, keepdims=True)        # (2, 1)  lane reduce (XLU)
    o_ref[...] = v_ref[...] + w_sum                           # single VPU add


def _pick_row_tile(rows):
    for t in (MAX_ROW_TILE, 512, 256, 128, 64, 32, 16, 8):
        if rows >= t and rows % t == 0:
            return t
    return rows  # full extent (bypasses the (8,128) divisibility rule)


def my_module_forward(v, weights):
    """v: (B, 2) f32; weights: (NUM_MODS, 2) f32 -> (B, 2) f32.

    Semantics: v <- w_0 + v; ...; v <- w_9 + v  (== v + sum(weights), modulo
    f32 addition order, as accepted by the review)."""
    B, C = v.shape
    assert C == 2 and weights.shape == (NUM_MODS, 2)

    if B >= (LANES // 2) and B % (LANES // 2) == 0:
        # Lane-dense path: (B, 2) -> (rows, 128); 1-D parallel grid over rows.
        rows = (B * 2) // LANES
        v2 = v.reshape(rows, LANES)
        tile = _pick_row_tile(rows)
        out = pl.pallas_call(
            _reduce_add_lane_dense_kernel,
            out_shape=jax.ShapeDtypeStruct((rows, LANES), v.dtype),
            grid=(rows // tile,),
            in_specs=[
                pl.BlockSpec((NUM_MODS, 2), lambda i: (0, 0)),
                pl.BlockSpec((tile, LANES), lambda i: (i, 0)),
            ],
            out_specs=pl.BlockSpec((tile, LANES), lambda i: (i, 0)),
            compiler_params=pltpu.CompilerParams(
                dimension_semantics=("parallel",),
            ),
        )(weights, v2)
        return out.reshape(B, 2)

    # Fallback for small / odd B: batch on lanes via transpose, single block.
    out_t = pl.pallas_call(
        _reduce_add_transposed_kernel,
        out_shape=jax.ShapeDtypeStruct((2, B), v.dtype),
        in_specs=[
            pl.BlockSpec((2, NUM_MODS), lambda: (0, 0)),
            pl.BlockSpec((2, B), lambda: (0, 0)),
        ],
        out_specs=pl.BlockSpec((2, B), lambda: (0, 0)),
    )(weights.T, v.T)
    return out_t.T


if __name__ == "__main__":
    key = jax.random.PRNGKey(0)
    k_w, k_v1, k_v2 = jax.random.split(key, 3)

    # Deterministic "parameters": one (2,) weight per SubModule, stacked.
    weights = jax.random.normal(k_w, (NUM_MODS, 2), dtype=jnp.float32)

    # Small input matching the module's usage (broadcast (2,) over (B, 2)).
    v_small = jax.random.normal(k_v1, (4, 2), dtype=jnp.float32)
    out_small = jax.block_until_ready(my_module_forward(v_small, weights))
    ref_small = v_small + jnp.sum(weights, axis=0)
    assert jnp.allclose(out_small, ref_small, atol=1e-5, rtol=1e-5), (out_small, ref_small)

    # Also exercise the lane-dense / gridded path (still tiny: (512, 2)).
    v_big = jax.random.normal(k_v2, (512, 2), dtype=jnp.float32)
    out_big = jax.block_until_ready(my_module_forward(v_big, weights))
    ref_big = v_big + jnp.sum(weights, axis=0)
    assert jnp.allclose(out_big, ref_big, atol=1e-5, rtol=1e-5), (out_big, ref_big)

    print("KERNEL_OK")
</pallas_src>

<mosaic_0001>
module attributes {stable_mosaic.version = 11 : i64} {
  func.func @_reduce_add_transposed_kernel(%arg0: memref<2x10xf32, #tpu.memory_space<vmem>>, %arg1: memref<2x4xf32, #tpu.memory_space<vmem>>, %arg2: memref<2x4xf32, #tpu.memory_space<vmem>>) attributes {dimension_semantics = [], scalar_prefetch = 0 : i64, scratch_operands = 0 : i64, tpu.core_type = #tpu.core_type<tc>} {
    %c0 = arith.constant 0 : index
    %c0_0 = arith.constant 0 : index
    %0 = vector.load %arg0[%c0, %c0_0] : memref<2x10xf32, #tpu.memory_space<vmem>>, vector<2x10xf32>
    %cst = arith.constant dense<0.000000e+00> : vector<2xf32>
    %1 = vector.multi_reduction <add>, %0, %cst [1] : vector<2x10xf32> to vector<2xf32>
    %2 = vector.shape_cast %1 : vector<2xf32> to vector<2x1xf32>
    %c0_1 = arith.constant 0 : index
    %c0_2 = arith.constant 0 : index
    %3 = vector.load %arg1[%c0_1, %c0_2] : memref<2x4xf32, #tpu.memory_space<vmem>>, vector<2x4xf32>
    %4 = vector.broadcast %2 : vector<2x1xf32> to vector<2x4xf32>
    %5 = arith.addf %3, %4 : vector<2x4xf32>
    %c0_3 = arith.constant 0 : index
    %c0_4 = arith.constant 0 : index
    %6 = vector.load %arg2[%c0_3, %c0_4] : memref<2x4xf32, #tpu.memory_space<vmem>>, vector<2x4xf32>
    tpu.vector_store %arg2[%c0_3, %c0_4], %5 {strides = array<i32>} : memref<2x4xf32, #tpu.memory_space<vmem>>, vector<2x4xf32>,
    return
  }
}

</mosaic_0001>

<llo_original>
// kernel: tpu_custom_call.1
$region0: #{tpu_custom_call.1}
  #allocation0 [shape = 'u32[]', space=smem, size = 0x4, offset = 0x4, fixed_abs, tag = 'smem constant byte address 0x4 - core index']
  #allocation1 [shape = 'u32[144,128]{1,0:T(1,128)}', space=vmem, size = 0x12000, scoped, tag = 'internal scratch']
  %s0 = inlined_call_operand.hbm [shape: f32[2,10], index: 0, kind: input, shape index: {}]
  %s1 = inlined_call_operand.vmem [shape: f32[2,4], index: 1, kind: input, shape index: {}]
  %s2 = inlined_call_operand.hbm [shape: f32[2,4], index: 2, kind: output, shape index: {}]
  %s3 = sld [smem:[#allocation0]]
  $region22: #{tpu_custom_call.1} parent=0
    _
  %s5 = ssub.s32 1, %s3
  %s6 = scalar_select 0, %s5, %s3
  $region1: #{tpu_custom_call.1} parent=0
    #allocation2 [shape = 'u8[1024]{0}', space=vmem, size = 0x400, scoped, tag = 'input window, operand 0, single buffered']
    #allocation3 [shape = 's32[1]{0}', space=sflag, size = 0x4, scoped, tag = 'scoped memory for tpu_custom_call.1']
    #allocation4 [shape = 's32[1]{0}', space=sflag, size = 0x4, scoped, tag = 'scoped memory for tpu_custom_call.1']
    #allocation5 [shape = 'u8[1024]{0}', space=vmem, size = 0x400, scoped, tag = 'output window, operand 0, single buffered']
    %7 = vsyncpa [#allocation3], 0
    %8 = vsyncpa [#allocation4], 0
    // Predicated region
    $region2: #{tpu_custom_call.1} parent=1 // pred_check
      _
    $region3: #{tpu_custom_call.1} parent=1 // pred_check_branch
      %10 = sbr.rel (0) target = $region5
    $region4: #{tpu_custom_call.1} parent=1 // pred_region
      %s12 = ssub.s32 32, 32
      %13 = vsyncadd [#allocation3], %s12
      %s15 = sshll.u32 [#allocation2], 4
      %s16 = int_to_ptr.vmem [resolvable:$true] %s15
      %18 = dma.hbm_to_vmem [thread:$0]  %s0, 32, %s16, [#allocation3]
    $region5: #{tpu_custom_call.1} parent=1 // pred_fallthru
      _
    // Predicated region
    $region6: #{tpu_custom_call.1} parent=1 // pred_check
      _
    $region7: #{tpu_custom_call.1} parent=1 // pred_check_branch
      %20 = sbr.rel (0) target = $region9
    $region8: #{tpu_custom_call.1} parent=1 // pred_region
      _
    $region9: #{tpu_custom_call.1} parent=1 // pred_fallthru
      _
    // Predicated region
    $region10: #{tpu_custom_call.1} parent=1 // pred_check
      _
    $region11: #{tpu_custom_call.1} parent=1 // pred_check_branch
      %22 = sbr.rel (0) target = $region13
    $region12: #{tpu_custom_call.1} parent=1 // pred_region
      %23 = dma.done [#allocation3], 32
    $region13: #{tpu_custom_call.1} parent=1 // pred_fallthru
      _
    %v24 = vld [vmem:[#allocation2] sm:$0x3]
    %vm25 = vcmask 74752
    %v26 = vsel %vm25, %v24, 0.0
    %27 = vadd.xlane.f32.xlu0 %v26
    %v28 = vpop.xlane.xlu0 %27
    %v29 = vld [vmem:[%s1] sm:$0x3]
    %v30 = vadd.f32 %v29, %v28
    %vm31 = vcmask 25600
    %32 = vst.msk [vmem:[#allocation5] sm:$0x3] %vm31, %v30
    // Predicated region
    $region14: #{tpu_custom_call.1} parent=1 // pred_check
      _
    $region15: #{tpu_custom_call.1} parent=1 // pred_check_branch
      %34 = sbr.rel (0) target = $region17
    $region16: #{tpu_custom_call.1} parent=1 // pred_region
      %s36 = ssub.s32 32, 32
      %37 = vsyncadd [#allocation4], %s36
      %s39 = sshll.u32 [#allocation5], 4
      %s40 = int_to_ptr.vmem [resolvable:$true] %s39
      %42 = dma.vmem_to_hbm [thread:$0]  %s40, 32, %s2, [#allocation4]
    $region17: #{tpu_custom_call.1} parent=1 // pred_fallthru
      _
    // Predicated region
    $region18: #{tpu_custom_call.1} parent=1 // pred_check
      _
    $region19: #{tpu_custom_call.1} parent=1 // pred_check_branch
      %44 = sbr.rel (0) target = $region21
    $region20: #{tpu_custom_call.1} parent=1 // pred_region
      %45 = dma.done [#allocation4], 32
    $region21: #{tpu_custom_call.1} parent=1 // pred_fallthru
      _
    %46 = vsyncpa [#allocation3], 1
    %47 = vsyncpa [#allocation4], 1

</llo_original>
